<compile_context>
chip_gen: v5e
topology: v5e:2x2
jax: 0.10.0
libtpu: 0.0.40
codegen_flags: <defaults>
</compile_context>

<pallas_src>
import functools

import jax
import jax.numpy as jnp
from jax import lax
from jax.experimental import pallas as pl
from jax.experimental.pallas import tpu as pltpu

LEAKY_SLOPE = 0.2
EPS = 1e-5                       # nn.InstanceNorm2d default
_LANE = 128
_VMEM_LIMIT_BYTES = 32 * 1024 * 1024
_FUSED_VMEM_BUDGET = 20 * 1024 * 1024
_TILE_BUDGET_BYTES = 4 * 1024 * 1024


def _round_up(x, m):
    return (x + m - 1) // m * m


def _pick_row_tile(oh, ow, cin, coutp, cap=None):
    """Largest divisor of OH (<= cap) whose per-tile f32 working set fits the budget."""
    cap = oh if cap is None else max(1, min(cap, oh))
    best = 1
    for tr in range(1, cap + 1):
        if oh % tr == 0 and tr * ow * (cin + 3 * coutp) * 4 <= _TILE_BUDGET_BYTES:
            best = tr
    return best


def _fused_fits(s, hq, wq, cin, oh, ow, coutp, in_bytes, out_bytes):
    """Conservative VMEM estimate (layout-padded) for the fused single-pass kernel."""
    x_b = s * s * hq * _round_up(wq, 8) * _round_up(cin, _LANE) * in_bytes
    w_b = 9 * _round_up(cin, 8) * coutp * in_bytes
    acc_b = _round_up(oh * ow, 8) * coutp * 4
    o_b = oh * _round_up(ow, 8) * coutp * out_bytes
    return 2 * x_b + w_b + 3 * acc_b + 2 * o_b <= _FUSED_VMEM_BUDGET


def _conv_taps(x_ref, w_ref, stride, row0, tr, ow, coutp):
    """3x3 conv on [row0, row0+tr) output rows as 9 shifted matmuls; f32 accumulation.

    x_ref: (S*S, Hq, Wq, Cin) stride-phase-split, zero-padded NHWC image (one batch elem).
    w_ref: (9, Cin, Coutp) tap-major weights, lane-dense Coutp.
    """
    cin = x_ref.shape[-1]
    acc = jnp.zeros((tr * ow, coutp), dtype=jnp.float32)
    for kh in range(3):
        for kw in range(3):
            ph, pw = kh % stride, kw % stride            # stride phase (static)
            ro, co = kh // stride, kw // stride          # offset inside the phase plane
            tap = x_ref[ph * stride + pw,
                        pl.ds(row0 + ro, tr),
                        pl.ds(co, ow), :]                # (TR, OW, Cin) contiguous slice
            # Native dtype straight into the MXU; f32 accumulation.
            acc = acc + jnp.dot(tap.reshape(tr * ow, cin), w_ref[kh * 3 + kw],
                                preferred_element_type=jnp.float32)
    return acc


def _fused_kernel(x_ref, w_ref, g_ref, b_ref, o_ref, *, stride):
    # One batch element per grid step: conv + instance norm + affine + LeakyReLU.
    oh, ow, coutp = o_ref.shape
    acc = _conv_taps(x_ref, w_ref, stride, 0, oh, ow, coutp)     # (OH*OW, Coutp) f32
    inv = 1.0 / float(oh * ow)
    mean = jnp.sum(acc, axis=0, keepdims=True) * inv             # (1, Coutp)
    ex2 = jnp.sum(acc * acc, axis=0, keepdims=True) * inv
    var = jnp.maximum(ex2 - mean * mean, 0.0)                    # biased variance
    scale = g_ref[...] * lax.rsqrt(var + EPS)
    shift = b_ref[...] - mean * scale
    z = acc * scale + shift
    z = jnp.where(z >= 0, z, LEAKY_SLOPE * z)                    # LeakyReLU(0.2)
    o_ref[...] = z.reshape(oh, ow, coutp).astype(o_ref.dtype)


def _conv_kernel(x_ref, w_ref, y_ref, stats_ref, *, stride):
    # Two-pass path, pass 1: conv tile + per-tile per-channel (sum, sumsq) partials.
    tr, ow, coutp = y_ref.shape
    row0 = pl.multiple_of(pl.program_id(1) * tr, tr)
    acc = _conv_taps(x_ref, w_ref, stride, row0, tr, ow, coutp)
    y_ref[...] = acc.reshape(tr, ow, coutp).astype(y_ref.dtype)
    stats_ref[0:1, :] = jnp.sum(acc, axis=0, keepdims=True)
    stats_ref[1:2, :] = jnp.sum(acc * acc, axis=0, keepdims=True)


def _norm_kernel(stats_ref, gamma_ref, beta_ref, y_ref, o_ref, *, inv_count):
    # Two-pass path, pass 2: normalize + affine + LeakyReLU, streamed over row tiles.
    mean = stats_ref[0:1, :] * inv_count                 # (1, Coutp)
    ex2 = stats_ref[1:2, :] * inv_count
    var = jnp.maximum(ex2 - mean * mean, 0.0)
    scale = gamma_ref[...] * lax.rsqrt(var + EPS)
    shift = beta_ref[...] - mean * scale
    y = y_ref[...].astype(jnp.float32)                   # (TR, OW, Coutp)
    z = y * scale.reshape(1, 1, -1) + shift.reshape(1, 1, -1)
    z = jnp.where(z >= 0, z, LEAKY_SLOPE * z)
    o_ref[...] = z.astype(o_ref.dtype)


@functools.partial(jax.jit,
                   static_argnames=("in_channels", "out_channels",
                                    "force_two_pass", "row_tile_cap"))
def conv_block_forward(x_nchw, weight, gamma, beta, *, in_channels, out_channels,
                       force_two_pass=False, row_tile_cap=None):
    """Matches ConvBlock.forward. x_nchw: (N, Cin, H, W) -> (N, Cout, OH, OW)."""
    down = in_channels != out_channels
    s = 2 if down else 1

    n, cin, h, w = x_nchw.shape
    assert cin == in_channels
    oh = (h + 2 - 3) // s + 1
    ow = (w + 2 - 3) // s + 1

    # NCHW -> NHWC (channels on the lane axis).
    # TODO(synk): carry NHWC activations end-to-end in the surrounding model to drop the
    # two transposes (two full HBM passes per layer).
    x = jnp.transpose(x_nchw, (0, 2, 3, 1))

    # Zero-pad spatially (conv padding=1), round H/W up to multiples of the stride, and
    # split into stride-phases so every conv tap is a contiguous slice of one phase plane:
    #   xph[b, (kh%s)*s + (kw%s), r + kh//s, c + kw//s, :] == xpad[b, s*r + kh, s*c + kw, :]
    xp = jnp.pad(x, ((0, 0), (1, 1), (1, 1), (0, 0)))
    hp, wp = h + 2, w + 2
    hq, wq = -(-hp // s), -(-wp // s)
    xp = jnp.pad(xp, ((0, 0), (0, hq * s - hp), (0, wq * s - wp), (0, 0)))
    xph = (xp.reshape(n, hq, s, wq, s, cin)
             .transpose(0, 2, 4, 1, 3, 5)
             .reshape(n * s * s, hq, wq, cin))           # batch & phase folded (4-D)

    # Lane-dense output channels: pad Cout up to a multiple of 128 (stripped at the end).
    coutp = _round_up(out_channels, _LANE)
    pad_c = coutp - out_channels
    # PyTorch weight (Cout, Cin, 3, 3) -> tap-major (9, Cin, Coutp); keep native dtype.
    w_taps = jnp.transpose(weight, (2, 3, 1, 0)).reshape(9, cin, out_channels)
    w_taps = jnp.pad(w_taps, ((0, 0), (0, 0), (0, pad_c)))
    gam = jnp.pad(gamma, (0, pad_c)).reshape(1, coutp).astype(jnp.float32)
    bet = jnp.pad(beta, (0, pad_c)).reshape(1, coutp).astype(jnp.float32)

    itemsize = x.dtype.itemsize
    fused = (not force_two_pass) and _fused_fits(s, hq, wq, cin, oh, ow, coutp,
                                                 itemsize, itemsize)

    if fused:
        # Single-pass fused kernel: grid over batch only; one HBM write of the result.
        out = pl.pallas_call(
            functools.partial(_fused_kernel, stride=s),
            out_shape=jax.ShapeDtypeStruct((n, oh, ow, coutp), x.dtype),
            grid_spec=pltpu.PrefetchScalarGridSpec(
                num_scalar_prefetch=0,
                grid=(n,),
                in_specs=[
                    pl.BlockSpec((s * s, hq, wq, cin), lambda b: (b, 0, 0, 0)),
                    pl.BlockSpec((9, cin, coutp), lambda b: (0, 0, 0)),
                    pl.BlockSpec((1, coutp), lambda b: (0, 0)),
                    pl.BlockSpec((1, coutp), lambda b: (0, 0)),
                ],
                out_specs=pl.BlockSpec((None, oh, ow, coutp),
                                       lambda b: (b, 0, 0, 0)),
            ),
            compiler_params=pltpu.CompilerParams(
                dimension_semantics=("parallel",),
                vmem_limit_bytes=_VMEM_LIMIT_BYTES),
        )(xph, w_taps, gam, bet)
    else:
        # Two-pass fallback: row-tiled conv + streamed instance-norm reduction.
        tr = _pick_row_tile(oh, ow, cin, coutp, row_tile_cap)  # divisor of OH: exact stats
        n_rt = oh // tr
        cparams = pltpu.CompilerParams(
            dimension_semantics=("parallel", "parallel"),
            vmem_limit_bytes=_VMEM_LIMIT_BYTES)

        y, stats_part = pl.pallas_call(
            functools.partial(_conv_kernel, stride=s),
            out_shape=(jax.ShapeDtypeStruct((n, oh, ow, coutp), x.dtype),
                       jax.ShapeDtypeStruct((n, n_rt, 2, coutp), jnp.float32)),
            grid_spec=pltpu.PrefetchScalarGridSpec(
                num_scalar_prefetch=0,
                grid=(n, n_rt),
                in_specs=[
                    # Full phase-split image per batch element; constant block index
                    # along the row-tile axis keeps it resident (no re-DMA, no halos).
                    pl.BlockSpec((s * s, hq, wq, cin), lambda b, r: (b, 0, 0, 0)),
                    pl.BlockSpec((9, cin, coutp), lambda b, r: (0, 0, 0)),
                ],
                out_specs=(
                    pl.BlockSpec((None, tr, ow, coutp), lambda b, r: (b, r, 0, 0)),
                    pl.BlockSpec((None, None, 2, coutp), lambda b, r: (b, r, 0, 0)),
                ),
            ),
            compiler_params=cparams,
        )(xph, w_taps)

        # Tiny XLA reduction of the per-tile partials (keeps both grid axes 'parallel').
        stats = jnp.sum(stats_part, axis=1)  # (N, 2, Coutp) f32

        out = pl.pallas_call(
            functools.partial(_norm_kernel, inv_count=1.0 / float(oh * ow)),
            out_shape=jax.ShapeDtypeStruct((n, oh, ow, coutp), x.dtype),
            grid_spec=pltpu.PrefetchScalarGridSpec(
                num_scalar_prefetch=0,
                grid=(n, n_rt),
                in_specs=[
                    pl.BlockSpec((None, 2, coutp), lambda b, r: (b, 0, 0)),
                    pl.BlockSpec((1, coutp), lambda b, r: (0, 0)),
                    pl.BlockSpec((1, coutp), lambda b, r: (0, 0)),
                    pl.BlockSpec((None, tr, ow, coutp), lambda b, r: (b, r, 0, 0)),
                ],
                out_specs=pl.BlockSpec((None, tr, ow, coutp),
                                       lambda b, r: (b, r, 0, 0)),
            ),
            compiler_params=cparams,
            input_output_aliases={3: 0},   # normalize in place over the conv output
        )(stats, gam, bet, y)

    # Strip channel padding; back to NCHW to match PyTorch semantics.
    out = out[..., :out_channels]
    return jnp.transpose(out, (0, 3, 1, 2))


def _reference(x_nchw, weight, gamma, beta, stride):
    """Pure-JAX reference (lax conv + instance norm + leaky relu)."""
    y = lax.conv_general_dilated(
        x_nchw, weight, window_strides=(stride, stride),
        padding=((1, 1), (1, 1)),
        dimension_numbers=("NCHW", "OIHW", "NCHW"))
    mean = jnp.mean(y, axis=(2, 3), keepdims=True)
    var = jnp.mean((y - mean) ** 2, axis=(2, 3), keepdims=True)
    y = (y - mean) * lax.rsqrt(var + EPS)
    y = y * gamma.reshape(1, -1, 1, 1) + beta.reshape(1, -1, 1, 1)
    return jnp.where(y >= 0, y, LEAKY_SLOPE * y)


if __name__ == "__main__":
    key = jax.random.PRNGKey(0)
    k_x, k_w, k_g, k_b, k_x2, k_w2 = jax.random.split(key, 6)

    # Down block: in != out -> stride 2 (fused path).
    N, CIN, COUT, H, W = 2, 4, 8, 16, 16
    x = jax.random.normal(k_x, (N, CIN, H, W), dtype=jnp.float32)
    weight = jax.random.normal(k_w, (COUT, CIN, 3, 3), dtype=jnp.float32) * 0.1
    gamma = jax.random.normal(k_g, (COUT,), dtype=jnp.float32) * 0.1 + 1.0
    beta = jax.random.normal(k_b, (COUT,), dtype=jnp.float32) * 0.1

    out = jax.block_until_ready(conv_block_forward(
        x, weight, gamma, beta, in_channels=CIN, out_channels=COUT))
    ref = _reference(x, weight, gamma, beta, stride=2)
    assert out.shape == ref.shape == (N, COUT, H // 2, W // 2), out.shape
    assert jnp.allclose(out, ref, atol=1e-4, rtol=1e-4), float(
        jnp.max(jnp.abs(out - ref)))

    # Same-channels block: in == out -> stride 1 (fused path).
    C2 = 8
    x2 = jax.random.normal(k_x2, (N, C2, H, W), dtype=jnp.float32)
    w2 = jax.random.normal(k_w2, (C2, C2, 3, 3), dtype=jnp.float32) * 0.1
    out2 = jax.block_until_ready(conv_block_forward(
        x2, w2, gamma, beta, in_channels=C2, out_channels=C2))
    ref2 = _reference(x2, w2, gamma, beta, stride=1)
    assert out2.shape == ref2.shape == (N, C2, H, W), out2.shape
    assert jnp.allclose(out2, ref2, atol=1e-4, rtol=1e-4), float(
        jnp.max(jnp.abs(out2 - ref2)))

    # Large-image fallback path: row-tiled two-pass streamed instance norm.
    out3 = jax.block_until_ready(conv_block_forward(
        x2, w2, gamma, beta, in_channels=C2, out_channels=C2,
        force_two_pass=True, row_tile_cap=4))
    assert jnp.allclose(out3, ref2, atol=1e-4, rtol=1e-4), float(
        jnp.max(jnp.abs(out3 - ref2)))

    print("KERNEL_OK")
</pallas_src>

<mosaic_0001>
module attributes {stable_mosaic.version = 11 : i64} {
  func.func @_fused_kernel(%arg0: i32, %arg1: memref<4x9x9x4xf32, #tpu.memory_space<vmem>>, %arg2: memref<9x4x128xf32, #tpu.memory_space<vmem>>, %arg3: memref<1x128xf32, #tpu.memory_space<vmem>>, %arg4: memref<1x128xf32, #tpu.memory_space<vmem>>, %arg5: memref<1x8x8x128xf32, #tpu.memory_space<vmem>>) attributes {dimension_semantics = [#tpu.dimension_semantics<parallel>], iteration_bounds = array<i64: 2>, scalar_prefetch = 0 : i64, scratch_operands = 0 : i64, tpu.core_type = #tpu.core_type<tc>, window_params = [{transform_indices = @transform_0, window_bounds = array<i64: 4, 9, 9, 4>}, {pipeline_mode = #tpu.pipeline_mode<synchronous>, transform_indices = @transform_1, window_bounds = array<i64: 9, 4, 128>}, {pipeline_mode = #tpu.pipeline_mode<synchronous>, transform_indices = @transform_2, window_bounds = array<i64: 1, 128>}, {pipeline_mode = #tpu.pipeline_mode<synchronous>, transform_indices = @transform_3, window_bounds = array<i64: 1, 128>}, {transform_indices = @transform_4, window_bounds = array<i64: 1, 8, 8, 128>}]} {
    %cst = arith.constant 0.000000e+00 : f32
    %0 = vector.broadcast %cst : f32 to vector<64x128xf32>
    %c0 = arith.constant 0 : index
    %c0_0 = arith.constant 0 : index
    %c0_1 = arith.constant 0 : index
    %c0_2 = arith.constant 0 : index
    %1 = vector.load %arg1[%c0, %c0_0, %c0_1, %c0_2] : memref<4x9x9x4xf32, #tpu.memory_space<vmem>>, vector<1x8x8x4xf32>
    %2 = vector.shape_cast %1 : vector<1x8x8x4xf32> to vector<8x8x4xf32>
    %3 = vector.shape_cast %2 : vector<8x8x4xf32> to vector<64x4xf32>
    %c0_3 = arith.constant 0 : index
    %c0_4 = arith.constant 0 : index
    %c0_5 = arith.constant 0 : index
    %4 = vector.load %arg2[%c0_3, %c0_4, %c0_5] : memref<9x4x128xf32, #tpu.memory_space<vmem>>, vector<1x4x128xf32>
    %5 = vector.shape_cast %4 : vector<1x4x128xf32> to vector<4x128xf32>
    %cst_6 = arith.constant dense<0.000000e+00> : vector<64x128xf32>
    %6 = tpu.matmul %3, %5, %cst_6 {dimension_numbers = #tpu.dot_dimension_numbers<[1], [0], [0], [1], [0, 0, 1, 1], [], []>} : vector<64x4xf32>, vector<4x128xf32>, vector<64x128xf32> -> vector<64x128xf32>
    %7 = arith.addf %0, %6 : vector<64x128xf32>
    %c1 = arith.constant 1 : index
    %c0_7 = arith.constant 0 : index
    %c0_8 = arith.constant 0 : index
    %c0_9 = arith.constant 0 : index
    %8 = vector.load %arg1[%c1, %c0_7, %c0_8, %c0_9] : memref<4x9x9x4xf32, #tpu.memory_space<vmem>>, vector<1x8x8x4xf32>
    %9 = vector.shape_cast %8 : vector<1x8x8x4xf32> to vector<8x8x4xf32>
    %10 = vector.shape_cast %9 : vector<8x8x4xf32> to vector<64x4xf32>
    %c1_10 = arith.constant 1 : index
    %c0_11 = arith.constant 0 : index
    %c0_12 = arith.constant 0 : index
    %11 = vector.load %arg2[%c1_10, %c0_11, %c0_12] : memref<9x4x128xf32, #tpu.memory_space<vmem>>, vector<1x4x128xf32>
    %12 = vector.shape_cast %11 : vector<1x4x128xf32> to vector<4x128xf32>
    %cst_13 = arith.constant dense<0.000000e+00> : vector<64x128xf32>
    %13 = tpu.matmul %10, %12, %cst_13 {dimension_numbers = #tpu.dot_dimension_numbers<[1], [0], [0], [1], [0, 0, 1, 1], [], []>} : vector<64x4xf32>, vector<4x128xf32>, vector<64x128xf32> -> vector<64x128xf32>
    %14 = arith.addf %7, %13 : vector<64x128xf32>
    %c0_14 = arith.constant 0 : index
    %c0_15 = arith.constant 0 : index
    %c1_16 = arith.constant 1 : index
    %c0_17 = arith.constant 0 : index
    %15 = vector.load %arg1[%c0_14, %c0_15, %c1_16, %c0_17] : memref<4x9x9x4xf32, #tpu.memory_space<vmem>>, vector<1x8x8x4xf32>
    %16 = vector.shape_cast %15 : vector<1x8x8x4xf32> to vector<8x8x4xf32>
    %17 = vector.shape_cast %16 : vector<8x8x4xf32> to vector<64x4xf32>
    %c2 = arith.constant 2 : index
    %c0_18 = arith.constant 0 : index
    %c0_19 = arith.constant 0 : index
    %18 = vector.load %arg2[%c2, %c0_18, %c0_19] : memref<9x4x128xf32, #tpu.memory_space<vmem>>, vector<1x4x128xf32>
    %19 = vector.shape_cast %18 : vector<1x4x128xf32> to vector<4x128xf32>
    %cst_20 = arith.constant dense<0.000000e+00> : vector<64x128xf32>
    %20 = tpu.matmul %17, %19, %cst_20 {dimension_numbers = #tpu.dot_dimension_numbers<[1], [0], [0], [1], [0, 0, 1, 1], [], []>} : vector<64x4xf32>, vector<4x128xf32>, vector<64x128xf32> -> vector<64x128xf32>
    %21 = arith.addf %14, %20 : vector<64x128xf32>
    %c2_21 = arith.constant 2 : index
    %c0_22 = arith.constant 0 : index
    %c0_23 = arith.constant 0 : index
    %c0_24 = arith.constant 0 : index
    %22 = vector.load %arg1[%c2_21, %c0_22, %c0_23, %c0_24] : memref<4x9x9x4xf32, #tpu.memory_space<vmem>>, vector<1x8x8x4xf32>
    %23 = vector.shape_cast %22 : vector<1x8x8x4xf32> to vector<8x8x4xf32>
    %24 = vector.shape_cast %23 : vector<8x8x4xf32> to vector<64x4xf32>
    %c3 = arith.constant 3 : index
    %c0_25 = arith.constant 0 : index
    %c0_26 = arith.constant 0 : index
    %25 = vector.load %arg2[%c3, %c0_25, %c0_26] : memref<9x4x128xf32, #tpu.memory_space<vmem>>, vector<1x4x128xf32>
    %26 = vector.shape_cast %25 : vector<1x4x128xf32> to vector<4x128xf32>
    %cst_27 = arith.constant dense<0.000000e+00> : vector<64x128xf32>
    %27 = tpu.matmul %24, %26, %cst_27 {dimension_numbers = #tpu.dot_dimension_numbers<[1], [0], [0], [1], [0, 0, 1, 1], [], []>} : vector<64x4xf32>, vector<4x128xf32>, vector<64x128xf32> -> vector<64x128xf32>
    %28 = arith.addf %21, %27 : vector<64x128xf32>
    %c3_28 = arith.constant 3 : index
    %c0_29 = arith.constant 0 : index
    %c0_30 = arith.constant 0 : index
    %c0_31 = arith.constant 0 : index
    %29 = vector.load %arg1[%c3_28, %c0_29, %c0_30, %c0_31] : memref<4x9x9x4xf32, #tpu.memory_space<vmem>>, vector<1x8x8x4xf32>
    %30 = vector.shape_cast %29 : vector<1x8x8x4xf32> to vector<8x8x4xf32>
    %31 = vector.shape_cast %30 : vector<8x8x4xf32> to vector<64x4xf32>
    %c4 = arith.constant 4 : index
    %c0_32 = arith.constant 0 : index
    %c0_33 = arith.constant 0 : index
    %32 = vector.load %arg2[%c4, %c0_32, %c0_33] : memref<9x4x128xf32, #tpu.memory_space<vmem>>, vector<1x4x128xf32>
    %33 = vector.shape_cast %32 : vector<1x4x128xf32> to vector<4x128xf32>
    %cst_34 = arith.constant dense<0.000000e+00> : vector<64x128xf32>
    %34 = tpu.matmul %31, %33, %cst_34 {dimension_numbers = #tpu.dot_dimension_numbers<[1], [0], [0], [1], [0, 0, 1, 1], [], []>} : vector<64x4xf32>, vector<4x128xf32>, vector<64x128xf32> -> vector<64x128xf32>
    %35 = arith.addf %28, %34 : vector<64x128xf32>
    %c2_35 = arith.constant 2 : index
    %c0_36 = arith.constant 0 : index
    %c1_37 = arith.constant 1 : index
    %c0_38 = arith.constant 0 : index
    %36 = vector.load %arg1[%c2_35, %c0_36, %c1_37, %c0_38] : memref<4x9x9x4xf32, #tpu.memory_space<vmem>>, vector<1x8x8x4xf32>
    %37 = vector.shape_cast %36 : vector<1x8x8x4xf32> to vector<8x8x4xf32>
    %38 = vector.shape_cast %37 : vector<8x8x4xf32> to vector<64x4xf32>
    %c5 = arith.constant 5 : index
    %c0_39 = arith.constant 0 : index
    %c0_40 = arith.constant 0 : index
    %39 = vector.load %arg2[%c5, %c0_39, %c0_40] : memref<9x4x128xf32, #tpu.memory_space<vmem>>, vector<1x4x128xf32>
    %40 = vector.shape_cast %39 : vector<1x4x128xf32> to vector<4x128xf32>
    %cst_41 = arith.constant dense<0.000000e+00> : vector<64x128xf32>
    %41 = tpu.matmul %38, %40, %cst_41 {dimension_numbers = #tpu.dot_dimension_numbers<[1], [0], [0], [1], [0, 0, 1, 1], [], []>} : vector<64x4xf32>, vector<4x128xf32>, vector<64x128xf32> -> vector<64x128xf32>
    %42 = arith.addf %35, %41 : vector<64x128xf32>
    %c0_42 = arith.constant 0 : index
    %c1_43 = arith.constant 1 : index
    %c0_44 = arith.constant 0 : index
    %c0_45 = arith.constant 0 : index
    %43 = vector.load %arg1[%c0_42, %c1_43, %c0_44, %c0_45] : memref<4x9x9x4xf32, #tpu.memory_space<vmem>>, vector<1x8x8x4xf32>
    %44 = vector.shape_cast %43 : vector<1x8x8x4xf32> to vector<8x8x4xf32>
    %45 = vector.shape_cast %44 : vector<8x8x4xf32> to vector<64x4xf32>
    %c6 = arith.constant 6 : index
    %c0_46 = arith.constant 0 : index
    %c0_47 = arith.constant 0 : index
    %46 = vector.load %arg2[%c6, %c0_46, %c0_47] : memref<9x4x128xf32, #tpu.memory_space<vmem>>, vector<1x4x128xf32>
    %47 = vector.shape_cast %46 : vector<1x4x128xf32> to vector<4x128xf32>
    %cst_48 = arith.constant dense<0.000000e+00> : vector<64x128xf32>
    %48 = tpu.matmul %45, %47, %cst_48 {dimension_numbers = #tpu.dot_dimension_numbers<[1], [0], [0], [1], [0, 0, 1, 1], [], []>} : vector<64x4xf32>, vector<4x128xf32>, vector<64x128xf32> -> vector<64x128xf32>
    %49 = arith.addf %42, %48 : vector<64x128xf32>
    %c1_49 = arith.constant 1 : index
    %c1_50 = arith.constant 1 : index
    %c0_51 = arith.constant 0 : index
    %c0_52 = arith.constant 0 : index
    %50 = vector.load %arg1[%c1_49, %c1_50, %c0_51, %c0_52] : memref<4x9x9x4xf32, #tpu.memory_space<vmem>>, vector<1x8x8x4xf32>
    %51 = vector.shape_cast %50 : vector<1x8x8x4xf32> to vector<8x8x4xf32>
    %52 = vector.shape_cast %51 : vector<8x8x4xf32> to vector<64x4xf32>
    %c7 = arith.constant 7 : index
    %c0_53 = arith.constant 0 : index
    %c0_54 = arith.constant 0 : index
    %53 = vector.load %arg2[%c7, %c0_53, %c0_54] : memref<9x4x128xf32, #tpu.memory_space<vmem>>, vector<1x4x128xf32>
    %54 = vector.shape_cast %53 : vector<1x4x128xf32> to vector<4x128xf32>
    %cst_55 = arith.constant dense<0.000000e+00> : vector<64x128xf32>
    %55 = tpu.matmul %52, %54, %cst_55 {dimension_numbers = #tpu.dot_dimension_numbers<[1], [0], [0], [1], [0, 0, 1, 1], [], []>} : vector<64x4xf32>, vector<4x128xf32>, vector<64x128xf32> -> vector<64x128xf32>
    %56 = arith.addf %49, %55 : vector<64x128xf32>
    %c0_56 = arith.constant 0 : index
    %c1_57 = arith.constant 1 : index
    %c1_58 = arith.constant 1 : index
    %c0_59 = arith.constant 0 : index
    %57 = vector.load %arg1[%c0_56, %c1_57, %c1_58, %c0_59] : memref<4x9x9x4xf32, #tpu.memory_space<vmem>>, vector<1x8x8x4xf32>
    %58 = vector.shape_cast %57 : vector<1x8x8x4xf32> to vector<8x8x4xf32>
    %59 = vector.shape_cast %58 : vector<8x8x4xf32> to vector<64x4xf32>
    %c8 = arith.constant 8 : index
    %c0_60 = arith.constant 0 : index
    %c0_61 = arith.constant 0 : index
    %60 = vector.load %arg2[%c8, %c0_60, %c0_61] : memref<9x4x128xf32, #tpu.memory_space<vmem>>, vector<1x4x128xf32>
    %61 = vector.shape_cast %60 : vector<1x4x128xf32> to vector<4x128xf32>
    %cst_62 = arith.constant dense<0.000000e+00> : vector<64x128xf32>
    %62 = tpu.matmul %59, %61, %cst_62 {dimension_numbers = #tpu.dot_dimension_numbers<[1], [0], [0], [1], [0, 0, 1, 1], [], []>} : vector<64x4xf32>, vector<4x128xf32>, vector<64x128xf32> -> vector<64x128xf32>
    %63 = arith.addf %56, %62 : vector<64x128xf32>
    %cst_63 = arith.constant dense<0.000000e+00> : vector<128xf32>
    %64 = vector.multi_reduction <add>, %63, %cst_63 [0] : vector<64x128xf32> to vector<128xf32>
    %65 = vector.shape_cast %64 : vector<128xf32> to vector<1x128xf32>
    %cst_64 = arith.constant 1.562500e-02 : f32
    %66 = vector.broadcast %cst_64 : f32 to vector<1x128xf32>
    %67 = arith.mulf %65, %66 : vector<1x128xf32>
    %68 = arith.mulf %63, %63 : vector<64x128xf32>
    %cst_65 = arith.constant dense<0.000000e+00> : vector<128xf32>
    %69 = vector.multi_reduction <add>, %68, %cst_65 [0] : vector<64x128xf32> to vector<128xf32>
    %70 = vector.shape_cast %69 : vector<128xf32> to vector<1x128xf32>
    %cst_66 = arith.constant 1.562500e-02 : f32
    %71 = vector.broadcast %cst_66 : f32 to vector<1x128xf32>
    %72 = arith.mulf %70, %71 : vector<1x128xf32>
    %73 = arith.mulf %67, %67 : vector<1x128xf32>
    %74 = arith.subf %72, %73 : vector<1x128xf32>
    %cst_67 = arith.constant 0.000000e+00 : f32
    %75 = vector.broadcast %cst_67 : f32 to vector<1x128xf32>
    %76 = arith.maximumf %74, %75 : vector<1x128xf32>
    %c0_68 = arith.constant 0 : index
    %c0_69 = arith.constant 0 : index
    %77 = vector.load %arg3[%c0_68, %c0_69] : memref<1x128xf32, #tpu.memory_space<vmem>>, vector<1x128xf32>
    %cst_70 = arith.constant 9.99999974E-6 : f32
    %78 = vector.broadcast %cst_70 : f32 to vector<1x128xf32>
    %79 = arith.addf %76, %78 : vector<1x128xf32>
    %80 = math.rsqrt %79 : vector<1x128xf32>
    %81 = arith.mulf %77, %80 : vector<1x128xf32>
    %c0_71 = arith.constant 0 : index
    %c0_72 = arith.constant 0 : index
    %82 = vector.load %arg4[%c0_71, %c0_72] : memref<1x128xf32, #tpu.memory_space<vmem>>, vector<1x128xf32>
    %83 = arith.mulf %67, %81 : vector<1x128xf32>
    %84 = arith.subf %82, %83 : vector<1x128xf32>
    %85 = vector.broadcast %81 : vector<1x128xf32> to vector<64x128xf32>
    %86 = arith.mulf %63, %85 : vector<64x128xf32>
    %87 = vector.broadcast %84 : vector<1x128xf32> to vector<64x128xf32>
    %88 = arith.addf %86, %87 : vector<64x128xf32>
    %cst_73 = arith.constant 0.000000e+00 : f32
    %89 = vector.broadcast %cst_73 : f32 to vector<64x128xf32>
    %90 = arith.cmpf oge, %88, %89 : vector<64x128xf32>
    %cst_74 = arith.constant 2.000000e-01 : f32
    %91 = vector.broadcast %cst_74 : f32 to vector<64x128xf32>
    %92 = arith.mulf %91, %88 : vector<64x128xf32>
    %93 = arith.select %90, %88, %92 : vector<64x128xi1>, vector<64x128xf32>
    %94 = vector.shape_cast %93 : vector<64x128xf32> to vector<8x8x128xf32>
    %c0_75 = arith.constant 0 : index
    %c0_76 = arith.constant 0 : index
    %c0_77 = arith.constant 0 : index
    %c0_78 = arith.constant 0 : index
    %95 = vector.load %arg5[%c0_75, %c0_76, %c0_77, %c0_78] : memref<1x8x8x128xf32, #tpu.memory_space<vmem>>, vector<1x8x8x128xf32>
    %96 = vector.shape_cast %95 : vector<1x8x8x128xf32> to vector<8x8x128xf32>
    %97 = vector.shape_cast %94 : vector<8x8x128xf32> to vector<1x8x8x128xf32>
    tpu.vector_store %arg5[%c0_75, %c0_76, %c0_77, %c0_78], %97 {strides = array<i32>} : memref<1x8x8x128xf32, #tpu.memory_space<vmem>>, vector<1x8x8x128xf32>,
    return
  }
  func.func @transform_0(%arg0: i32) -> (i32, i32, i32, i32) {
    %c0_i32 = arith.constant 0 : i32
    %c0_i32_0 = arith.constant 0 : i32
    %c0_i32_1 = arith.constant 0 : i32
    %c0_i32_2 = arith.constant 0 : i32
    return %arg0, %c0_i32, %c0_i32_0, %c0_i32_1 : i32, i32, i32, i32
  }
  func.func @transform_1(%arg0: i32) -> (i32, i32, i32) {
    %c0_i32 = arith.constant 0 : i32
    %c0_i32_0 = arith.constant 0 : i32
    %c0_i32_1 = arith.constant 0 : i32
    %c0_i32_2 = arith.constant 0 : i32
    return %c0_i32, %c0_i32_0, %c0_i32_1 : i32, i32, i32
  }
  func.func @transform_2(%arg0: i32) -> (i32, i32) {
    %c0_i32 = arith.constant 0 : i32
    %c0_i32_0 = arith.constant 0 : i32
    %c0_i32_1 = arith.constant 0 : i32
    return %c0_i32, %c0_i32_0 : i32, i32
  }
  func.func @transform_3(%arg0: i32) -> (i32, i32) {
    %c0_i32 = arith.constant 0 : i32
    %c0_i32_0 = arith.constant 0 : i32
    %c0_i32_1 = arith.constant 0 : i32
    return %c0_i32, %c0_i32_0 : i32, i32
  }
  func.func @transform_4(%arg0: i32) -> (i32, i32, i32, i32) {
    %c0_i32 = arith.constant 0 : i32
    %c0_i32_0 = arith.constant 0 : i32
    %c0_i32_1 = arith.constant 0 : i32
    %c0_i32_2 = arith.constant 0 : i32
    return %arg0, %c0_i32, %c0_i32_0, %c0_i32_1 : i32, i32, i32, i32
  }
}

</mosaic_0001>

<llo_original>
// kernel: conv_block_forward.1
$region0: #{conv_block_forward.1}
  #allocation0 [shape = 'u32[]', space=smem, size = 0x4, offset = 0x4, fixed_abs, tag = 'smem constant byte address 0x4 - core index']
  #allocation1 [shape = 'u32[72,128]{1,0:T(1,128)}', space=vmem, size = 0x9000, scoped, tag = 'internal scratch']
  %s0 = inlined_call_operand.vmem [shape: f32[8,9,9,4], index: 0, kind: input, shape index: {}]
  %s1 = inlined_call_operand.vmem [shape: f32[9,4,128], index: 1, kind: input, shape index: {}]
  %s2 = inlined_call_operand.vmem [shape: f32[1,128], index: 2, kind: input, shape index: {}]
  %s3 = inlined_call_operand.vmem [shape: f32[1,128], index: 3, kind: input, shape index: {}]
  %s4 = inlined_call_operand.vmem [shape: f32[2,8,8,128], index: 4, kind: output, shape index: {}]
  %s5 = sld [smem:[#allocation0]]
  $region49: #{conv_block_forward.1} parent=0
    _
  %s7 = ssub.s32 1, %s5
  %s8 = scalar_select 0, %s7, %s5
  loop: start=0, step=1, limit=4
  $region2: #{conv_block_forward.1} parent=0 // loop_pre_header
    _
  $region3: #{conv_block_forward.1} parent=0 // loop_header
    %s10 = sphi 0, %s14
    %p11 = scmp.ge.s32.totalorder %s10, 4
    %s20 = sphi 0, %s22
    %s23 = sphi 0, %s20
    %s24 = sphi 0, %s23
    %s40 = sphi 0, %s24
    %s44 = sphi 0, %s44
    %s46 = sphi 0, %s44
    %s47 = sphi 0, %s46
    %s61 = sphi 0, %s47
    %s65 = sphi 0, %s65
    %s67 = sphi 0, %s65
    %s68 = sphi 0, %s67
    %s82 = sphi 0, %s68
    %s86 = sphi 0, %s86
    %s88 = sphi 0, %s86
    %s89 = sphi 0, %s88
    %s103 = sphi 0, %s89
    %s109 = sphi 0, %s111
    %s112 = sphi 0, %s109
    %s113 = sphi 0, %s112
    %s129 = sphi 0, %s113
  $region4: #{conv_block_forward.1} parent=0 // loop_header_branch
    %13 = sbr.rel (%p11) target = $region8
  $region5: #{conv_block_forward.1} parent=0 // loop_body
    %s15 = ssub.s32 %s10, 1
    %s16 = ssub.s32 %s10, 2
    %s17 = sadd.s32 %s10, 1
    %s18 = ssub.s32 %s10, %s17
    %p19 = scmp.eq.s32.totalorder %s18, 0
    %s21 = sadd.s32 %s20, 1
    %s22 = scalar_select %p19, %s20, %s21
    %p25 = pneg %p19
    %p26 = scmp.eq.s32.totalorder %s10, 1
    %p27 = por %p25, %p26
    %p28 = scmp.ne.s32.totalorder %s20, %s23
    %p29 = scmp.eq.s32.totalorder %s10, 0
    %p30 = por %p28, %p29
    %p31 = scmp.ne.s32.totalorder %s20, %s23
    %p32 = scmp.eq.s32.totalorder %s15, 1
    %p33 = por %p31, %p32
    %p34 = scmp.ne.s32.totalorder %s23, %s24
    %p35 = scmp.eq.s32.totalorder %s15, 0
    %p36 = por %p34, %p35
    %p37 = scmp.ne.s32.totalorder %s23, %s24
    %p38 = scmp.eq.s32.totalorder %s16, 1
    %p39 = por %p37, %p38
    %p41 = scmp.ne.s32.totalorder %s24, %s40
    %p42 = scmp.eq.s32.totalorder %s16, 0
    %p43 = por %p41, %p42
    %s45 = sadd.s32 %s44, 1
    %p48 = scmp.eq.s32.totalorder %s10, 1
    %p49 = scmp.ne.s32.totalorder %s44, %s46
    %p50 = scmp.eq.s32.totalorder %s10, 0
    %p51 = por %p49, %p50
    %p52 = scmp.ne.s32.totalorder %s44, %s46
    %p53 = scmp.eq.s32.totalorder %s15, 1
    %p54 = por %p52, %p53
    %p55 = scmp.ne.s32.totalorder %s46, %s47
    %p56 = scmp.eq.s32.totalorder %s15, 0
    %p57 = por %p55, %p56
    %p58 = scmp.ne.s32.totalorder %s46, %s47
    %p59 = scmp.eq.s32.totalorder %s16, 1
    %p60 = por %p58, %p59
    %p62 = scmp.ne.s32.totalorder %s47, %s61
    %p63 = scmp.eq.s32.totalorder %s16, 0
    %p64 = por %p62, %p63
    %s66 = sadd.s32 %s65, 1
    %p69 = scmp.eq.s32.totalorder %s10, 1
    %p70 = scmp.ne.s32.totalorder %s65, %s67
    %p71 = scmp.eq.s32.totalorder %s10, 0
    %p72 = por %p70, %p71
    %p73 = scmp.ne.s32.totalorder %s65, %s67
    %p74 = scmp.eq.s32.totalorder %s15, 1
    %p75 = por %p73, %p74
    %p76 = scmp.ne.s32.totalorder %s67, %s68
    %p77 = scmp.eq.s32.totalorder %s15, 0
    %p78 = por %p76, %p77
    %p79 = scmp.ne.s32.totalorder %s67, %s68
    %p80 = scmp.eq.s32.totalorder %s16, 1
    %p81 = por %p79, %p80
    %p83 = scmp.ne.s32.totalorder %s68, %s82
    %p84 = scmp.eq.s32.totalorder %s16, 0
    %p85 = por %p83, %p84
    %s87 = sadd.s32 %s86, 1
    %p90 = scmp.eq.s32.totalorder %s10, 1
    %p91 = scmp.ne.s32.totalorder %s86, %s88
    %p92 = scmp.eq.s32.totalorder %s10, 0
    %p93 = por %p91, %p92
    %p94 = scmp.ne.s32.totalorder %s86, %s88
    %p95 = scmp.eq.s32.totalorder %s15, 1
    %p96 = por %p94, %p95
    %p97 = scmp.ne.s32.totalorder %s88, %s89
    %p98 = scmp.eq.s32.totalorder %s15, 0
    %p99 = por %p97, %p98
    %p100 = scmp.ne.s32.totalorder %s88, %s89
    %p101 = scmp.eq.s32.totalorder %s16, 1
    %p102 = por %p100, %p101
    %p104 = scmp.ne.s32.totalorder %s89, %s103
    %p105 = scmp.eq.s32.totalorder %s16, 0
    %p106 = por %p104, %p105
    %s107 = ssub.s32 %s10, %s17
    %p108 = scmp.eq.s32.totalorder %s107, 0
    %s110 = sadd.s32 %s109, 1
    %s111 = scalar_select %p108, %s109, %s110
    %p114 = pneg %p108
    %p115 = scmp.eq.s32.totalorder %s10, 1
    %p116 = por %p114, %p115
    %p117 = scmp.ne.s32.totalorder %s109, %s112
    %p118 = scmp.eq.s32.totalorder %s10, 0
    %p119 = por %p117, %p118
    %p120 = scmp.ne.s32.totalorder %s109, %s112
    %p121 = scmp.eq.s32.totalorder %s15, 1
    %p122 = por %p120, %p121
    %p123 = scmp.ne.s32.totalorder %s112, %s113
    %p124 = scmp.eq.s32.totalorder %s15, 0
    %p125 = por %p123, %p124
    %p126 = scmp.ne.s32.totalorder %s112, %s113
    %p127 = scmp.eq.s32.totalorder %s16, 1
    %p128 = por %p126, %p127
    %p130 = scmp.ne.s32.totalorder %s113, %s129
    %p131 = scmp.eq.s32.totalorder %s16, 0
    %p132 = por %p130, %p131
    %p133 = scmp.le.s32.totalorder 1, %s10
    %p134 = scmp.lt.s32.totalorder %s10, 3
    %p135 = pnand %p133, %p134
    %p136 = pneg %p135
    // Predicated region
    $region9: #{conv_block_forward.1} parent=5 // pred_check
      _
    $region10: #{conv_block_forward.1} parent=5 // pred_check_branch
      %138 = sbr.rel (%p135) target = $region12
    $region11: #{conv_block_forward.1} parent=5 // pred_region
      %s139 = ssub.s32 %s10, 1
      // Predicated region
      $region13: #{conv_block_forward.1} parent=11 // pred_check
        %p140 = pneg %p57
      $region14: #{conv_block_forward.1} parent=11 // pred_check_branch
        %142 = sbr.rel (%p140) target = $region16
      $region15: #{conv_block_forward.1} parent=11 // pred_region
        _
      $region16: #{conv_block_forward.1} parent=11 // pred_fallthru
        _
      // Predicated region
      $region17: #{conv_block_forward.1} parent=11 // pred_check
        %p143 = pneg %p78
      $region18: #{conv_block_forward.1} parent=11 // pred_check_branch
        %145 = sbr.rel (%p143) target = $region20
      $region19: #{conv_block_forward.1} parent=11 // pred_region
        _
      $region20: #{conv_block_forward.1} parent=11 // pred_fallthru
        _
      // Predicated region
      $region21: #{conv_block_forward.1} parent=11 // pred_check
        %p146 = pneg %p99
      $region22: #{conv_block_forward.1} parent=11 // pred_check_branch
        %148 = sbr.rel (%p146) target = $region24
      $region23: #{conv_block_forward.1} parent=11 // pred_region
        _
      $region24: #{conv_block_forward.1} parent=11 // pred_fallthru
        _
    $region12: #{conv_block_forward.1} parent=5 // pred_fallthru
      _
    %p149 = scmp.lt.s32.totalorder %s10, 2
    // Predicated region
    $region25: #{conv_block_forward.1} parent=5 // pred_check
      %p150 = pneg %p149
    $region26: #{conv_block_forward.1} parent=5 // pred_check_branch
      %152 = sbr.rel (%p150) target = $region28
    $region27: #{conv_block_forward.1} parent=5 // pred_region
      // Predicated region
      $region29: #{conv_block_forward.1} parent=27 // pred_check
        %p153 = pneg %p30
      $region30: #{conv_block_forward.1} parent=27 // pred_check_branch
        %155 = sbr.rel (%p153) target = $region32
      $region31: #{conv_block_forward.1} parent=27 // pred_region
        %s156 = smul.u32 4, %s10
        %p157 = scmp.lt.s32.totalorder %s156, 7
        %s158 = scalar_select %p157, %s156, 7
        %s159 = smul.addr %s158, 18
        %s160 = smul.addr %s159, 8
        %s161 = scalar_lea.vmem %s0, %s160
        %s162 = smul.u32 4, %s10
      $region32: #{conv_block_forward.1} parent=27 // pred_fallthru
        _
    $region28: #{conv_block_forward.1} parent=5 // pred_fallthru
      _
    %p163 = scmp.le.s32.totalorder 1, %s10
    %p164 = scmp.lt.s32.totalorder %s10, 3
    %p165 = pnand %p163, %p164
    %p166 = pneg %p165
    // Predicated region
    $region33: #{conv_block_forward.1} parent=5 // pred_check
      _
    $region34: #{conv_block_forward.1} parent=5 // pred_check_branch
      %168 = sbr.rel (%p165) target = $region36
    $region35: #{conv_block_forward.1} parent=5 // pred_region
      %s169 = ssub.s32 %s10, 1
      %s170 = smul.u32 4, %s15
      %p171 = scmp.lt.s32.totalorder %s170, 7
      %s172 = scalar_select %p171, %s170, 7
      %s173 = smul.addr %s172, 18
      %s174 = smul.addr %s173, 8
      %s175 = scalar_lea.vmem %s0, %s174
      %p176 = pneg %p36
      %p177 = pneg %p33
      %p178 = pneg %p57
      %p179 = pneg %p54
      %p180 = pneg %p78
      %p181 = pneg %p75
      %p182 = pneg %p99
      %p183 = pneg %p96
      %p184 = pneg %p125
      %p185 = pneg %p122
      %p186 = scmp.lt.s32.totalorder %s15, 1
      %s187 = scalar_select %p186, %s15, 1
      %s188 = smul.addr %s187, 8
      %s189 = smul.addr %s188, 8
      %s190 = scalar_lea.vmem %s4, %s189
      %s191 = smul.u32 4, %s15
      %p192 = scmp.lt.s32.totalorder %s191, 7
      %s193 = scalar_select %p192, %s191, 7
      %s194 = smul.addr %s193, 18
      %s195 = smul.addr %s194, 8
      %s196 = scalar_lea.vmem %s0, %s195
      %s197 = smul.u32 4, %s15
      %p198 = scmp.lt.s32.totalorder %s15, 1
      %s199 = scalar_select %p198, %s15, 1
      %s200 = smul.addr %s199, 8
      %s201 = smul.addr %s200, 8
      %s202 = scalar_lea.vmem %s4, %s201
      %v203 = vld [vmem:[%s196] sm:$0xff]
      %v204 = vld [vmem:[%s196 + $0x10] sm:$0xff]
      %v205 = vld [vmem:[%s196 + $0x20] sm:$0xff]
      %v206 = vld [vmem:[%s196 + $0x30] sm:$0xff]
      %v207 = vld [vmem:[%s196 + $0x40] sm:$0xff]
      %v208 = vld [vmem:[%s196 + $0x50] sm:$0xff]
      %v209 = vld [vmem:[%s196 + $0x60] sm:$0xff]
      %v210 = vld [vmem:[%s196 + $0x70] sm:$0xff]
      %v211 = vld [vmem:[%s1] sm:$0xf]
      %s212 = scalar_lea.vmem %s196, 144
      %v213 = vld [vmem:[%s212] sm:$0xff]
      %v214 = vld [vmem:[%s212 + $0x10] sm:$0xff]
      %v215 = vld [vmem:[%s212 + $0x20] sm:$0xff]
      %v216 = vld [vmem:[%s212 + $0x30] sm:$0xff]
      %v217 = vld [vmem:[%s212 + $0x40] sm:$0xff]
      %v218 = vld [vmem:[%s212 + $0x50] sm:$0xff]
      %v219 = vld [vmem:[%s212 + $0x60] sm:$0xff]
      %v220 = vld [vmem:[%s212 + $0x70] sm:$0xff]
      %s221 = scalar_lea.vmem %s1, 4
      %v222 = vld [vmem:[%s221] sm:$0xf]
      %vm223 = vcmask 31744
      %v225 = vsel %vm223, %v213, 0
      %v228 = vsel %vm223, %v214, 0
      %v231 = vsel %vm223, %v215, 0
      %v234 = vsel %vm223, %v216, 0
      %v237 = vsel %vm223, %v217, 0
      %v240 = vsel %vm223, %v218, 0
      %v243 = vsel %vm223, %v219, 0
      %v246 = vsel %vm223, %v220, 0
      %vm248 = vcmask 1043456
      %v250 = vsel %vm248, %v222, 0
      %252 = vmatpush.msra.mxu0 0.0
      %253 = vmatpush.msra.mxu0 0.0
      %254 = vmatpush.msra.mxu0 0.0
      %255 = vmatpush.msra.mxu0 0.0
      %256 = vmatpush.msra.mxu0 0.0
      %257 = vmatpush.msra.mxu0 0.0
      %258 = vmatpush.msra.mxu0 0.0
      %259 = vmatpush.msra.mxu0 0.0
      %260 = vmatpush.msra.mxu0 0.0
      %261 = vmatpush.msra.mxu0 0.0
      %262 = vmatpush.msra.mxu0 0.0
      %263 = vmatpush.msra.mxu0 0.0
      %264 = vmatpush.msra.mxu0 0.0
      %265 = vmatpush.msra.mxu0 0.0
      %266 = vmatpush.msra.mxu0 0.0
      %267 = vmatpush.msra.mxu0 %v250
      %268 = vmatmul.f32.gmra.mxu0 %v225
      %v269 = vpop.f32.mrf.mxu0
      %v270 = vadd.f32 0.0, %v269
      %271 = vmatmul.f32.gmra.mxu0 %v228
      %v272 = vpop.f32.mrf.mxu0
      %v273 = vadd.f32 0.0, %v272
      %274 = vmatmul.f32.gmra.mxu0 %v231
      %v275 = vpop.f32.mrf.mxu0
      %v276 = vadd.f32 0.0, %v275
      %277 = vmatmul.f32.gmra.mxu0 %v234
      %v278 = vpop.f32.mrf.mxu0
      %v279 = vadd.f32 0.0, %v278
      %280 = vmatmul.f32.gmra.mxu0 %v237
      %v281 = vpop.f32.mrf.mxu0
      %v282 = vadd.f32 0.0, %v281
      %283 = vmatmul.f32.gmra.mxu0 %v240
      %v284 = vpop.f32.mrf.mxu0
      %v285 = vadd.f32 0.0, %v284
      %286 = vmatmul.f32.gmra.mxu0 %v243
      %v287 = vpop.f32.mrf.mxu0
      %v288 = vadd.f32 0.0, %v287
      %289 = vmatmul.f32.gmra.mxu0 %v246
      %v290 = vpop.f32.mrf.mxu0
      %v291 = vadd.f32 0.0, %v290
      %292 = vdwg.mxu0
      %v294 = vsel %vm223, %v203, 0
      %v297 = vsel %vm223, %v204, 0
      %v300 = vsel %vm223, %v205, 0
      %v303 = vsel %vm223, %v206, 0
      %v306 = vsel %vm223, %v207, 0
      %v309 = vsel %vm223, %v208, 0
      %v312 = vsel %vm223, %v209, 0
      %v315 = vsel %vm223, %v210, 0
      %v318 = vsel %vm248, %v211, 0
      %320 = vmatpush.msra.mxu0 0.0
      %321 = vmatpush.msra.mxu0 0.0
      %322 = vmatpush.msra.mxu0 0.0
      %323 = vmatpush.msra.mxu0 0.0
      %324 = vmatpush.msra.mxu0 0.0
      %325 = vmatpush.msra.mxu0 0.0
      %326 = vmatpush.msra.mxu0 0.0
      %327 = vmatpush.msra.mxu0 0.0
      %328 = vmatpush.msra.mxu0 0.0
      %329 = vmatpush.msra.mxu0 0.0
      %330 = vmatpush.msra.mxu0 0.0
      %331 = vmatpush.msra.mxu0 0.0
      %332 = vmatpush.msra.mxu0 0.0
      %333 = vmatpush.msra.mxu0 0.0
      %334 = vmatpush.msra.mxu0 0.0
      %335 = vmatpush.msra.mxu0 %v318
      %336 = vmatmul.f32.gmra.mxu0 %v294
      %v337 = vpop.f32.mrf.mxu0
      %v338 = vadd.f32 %v270, %v337
      %339 = vmatmul.f32.gmra.mxu0 %v297
      %v340 = vpop.f32.mrf.mxu0
      %v341 = vadd.f32 %v273, %v340
      %342 = vmatmul.f32.gmra.mxu0 %v300
      %v343 = vpop.f32.mrf.mxu0
      %v344 = vadd.f32 %v276, %v343
      %345 = vmatmul.f32.gmra.mxu0 %v303
      %v346 = vpop.f32.mrf.mxu0
      %v347 = vadd.f32 %v279, %v346
      %348 = vmatmul.f32.gmra.mxu0 %v306
      %v349 = vpop.f32.mrf.mxu0
      %v350 = vadd.f32 %v282, %v349
      %351 = vmatmul.f32.gmra.mxu0 %v309
      %v352 = vpop.f32.mrf.mxu0
      %v353 = vadd.f32 %v285, %v352
      %354 = vmatmul.f32.gmra.mxu0 %v312
      %v355 = vpop.f32.mrf.mxu0
      %v356 = vadd.f32 %v288, %v355
      %357 = vmatmul.f32.gmra.mxu0 %v315
      %v358 = vpop.f32.mrf.mxu0
      %v359 = vadd.f32 %v291, %v358
      %360 = vdwg.mxu0
      %v361 = vld [vmem:[%s196 + $0x1] sm:$0xff]
      %v362 = vld [vmem:[%s196 + $0x11] sm:$0xff]
      %v363 = vld [vmem:[%s196 + $0x21] sm:$0xff]
      %v364 = vld [vmem:[%s196 + $0x31] sm:$0xff]
      %v365 = vld [vmem:[%s196 + $0x41] sm:$0xff]
      %v366 = vld [vmem:[%s196 + $0x51] sm:$0xff]
      %v367 = vld [vmem:[%s196 + $0x61] sm:$0xff]
      %v368 = vld [vmem:[%s196 + $0x71] sm:$0xff]
      %s369 = scalar_lea.vmem %s1, 8
      %v370 = vld [vmem:[%s369] sm:$0xf]
      %v372 = vsel %vm223, %v361, 0
      %v375 = vsel %vm223, %v362, 0
      %v378 = vsel %vm223, %v363, 0
      %v381 = vsel %vm223, %v364, 0
      %v384 = vsel %vm223, %v365, 0
      %v387 = vsel %vm223, %v366, 0
      %v390 = vsel %vm223, %v367, 0
      %v393 = vsel %vm223, %v368, 0
      %v396 = vsel %vm248, %v370, 0
      %398 = vmatpush.msra.mxu0 0.0
      %399 = vmatpush.msra.mxu0 0.0
      %400 = vmatpush.msra.mxu0 0.0
      %401 = vmatpush.msra.mxu0 0.0
      %402 = vmatpush.msra.mxu0 0.0
      %403 = vmatpush.msra.mxu0 0.0
      %404 = vmatpush.msra.mxu0 0.0
      %405 = vmatpush.msra.mxu0 0.0
      %406 = vmatpush.msra.mxu0 0.0
      %407 = vmatpush.msra.mxu0 0.0
      %408 = vmatpush.msra.mxu0 0.0
      %409 = vmatpush.msra.mxu0 0.0
      %410 = vmatpush.msra.mxu0 0.0
      %411 = vmatpush.msra.mxu0 0.0
      %412 = vmatpush.msra.mxu0 0.0
      %413 = vmatpush.msra.mxu0 %v396
      %414 = vmatmul.f32.gmra.mxu0 %v372
      %v415 = vpop.f32.mrf.mxu0
      %v416 = vadd.f32 0.0, %v415
      %417 = vmatmul.f32.gmra.mxu0 %v375
      %v418 = vpop.f32.mrf.mxu0
      %v419 = vadd.f32 0.0, %v418
      %420 = vmatmul.f32.gmra.mxu0 %v378
      %v421 = vpop.f32.mrf.mxu0
      %v422 = vadd.f32 0.0, %v421
      %423 = vmatmul.f32.gmra.mxu0 %v381
      %v424 = vpop.f32.mrf.mxu0
      %v425 = vadd.f32 0.0, %v424
      %426 = vmatmul.f32.gmra.mxu0 %v384
      %v427 = vpop.f32.mrf.mxu0
      %v428 = vadd.f32 0.0, %v427
      %429 = vmatmul.f32.gmra.mxu0 %v387
      %v430 = vpop.f32.mrf.mxu0
      %v431 = vadd.f32 0.0, %v430
      %432 = vmatmul.f32.gmra.mxu0 %v390
      %v433 = vpop.f32.mrf.mxu0
      %v434 = vadd.f32 0.0, %v433
      %435 = vmatmul.f32.gmra.mxu0 %v393
      %v436 = vpop.f32.mrf.mxu0
      %v437 = vadd.f32 0.0, %v436
      %438 = vdwg.mxu0
      %v439 = vadd.f32 %v338, %v416
      %v440 = vadd.f32 %v341, %v419
      %v441 = vadd.f32 %v344, %v422
      %v442 = vadd.f32 %v347, %v425
      %v443 = vadd.f32 %v350, %v428
      %v444 = vadd.f32 %v353, %v431
      %v445 = vadd.f32 %v356, %v434
      %v446 = vadd.f32 %v359, %v437
      %s447 = scalar_lea.vmem %s196, 288
      %v448 = vld [vmem:[%s447] sm:$0xff]
      %v449 = vld [vmem:[%s447 + $0x10] sm:$0xff]
      %v450 = vld [vmem:[%s447 + $0x20] sm:$0xff]
      %v451 = vld [vmem:[%s447 + $0x30] sm:$0xff]
      %v452 = vld [vmem:[%s447 + $0x40] sm:$0xff]
      %v453 = vld [vmem:[%s447 + $0x50] sm:$0xff]
      %v454 = vld [vmem:[%s447 + $0x60] sm:$0xff]
      %v455 = vld [vmem:[%s447 + $0x70] sm:$0xff]
      %s456 = scalar_lea.vmem %s1, 12
      %v457 = vld [vmem:[%s456] sm:$0xf]
      %v459 = vsel %vm223, %v448, 0
      %v462 = vsel %vm223, %v449, 0
      %v465 = vsel %vm223, %v450, 0
      %v468 = vsel %vm223, %v451, 0
      %v471 = vsel %vm223, %v452, 0
      %v474 = vsel %vm223, %v453, 0
      %v477 = vsel %vm223, %v454, 0
      %v480 = vsel %vm223, %v455, 0
      %v483 = vsel %vm248, %v457, 0
      %485 = vmatpush.msra.mxu0 0.0
      %486 = vmatpush.msra.mxu0 0.0
      %487 = vmatpush.msra.mxu0 0.0
      %488 = vmatpush.msra.mxu0 0.0
      %489 = vmatpush.msra.mxu0 0.0
      %490 = vmatpush.msra.mxu0 0.0
      %491 = vmatpush.msra.mxu0 0.0
      %492 = vmatpush.msra.mxu0 0.0
      %493 = vmatpush.msra.mxu0 0.0
      %494 = vmatpush.msra.mxu0 0.0
      %495 = vmatpush.msra.mxu0 0.0
      %496 = vmatpush.msra.mxu0 0.0
      %497 = vmatpush.msra.mxu0 0.0
      %498 = vmatpush.msra.mxu0 0.0
      %499 = vmatpush.msra.mxu0 0.0
      %500 = vmatpush.msra.mxu0 %v483
      %501 = vmatmul.f32.gmra.mxu0 %v459
      %v502 = vpop.f32.mrf.mxu0
      %v503 = vadd.f32 0.0, %v502
      %504 = vmatmul.f32.gmra.mxu0 %v462
      %v505 = vpop.f32.mrf.mxu0
      %v506 = vadd.f32 0.0, %v505
      %507 = vmatmul.f32.gmra.mxu0 %v465
      %v508 = vpop.f32.mrf.mxu0
      %v509 = vadd.f32 0.0, %v508
      %510 = vmatmul.f32.gmra.mxu0 %v468
      %v511 = vpop.f32.mrf.mxu0
      %v512 = vadd.f32 0.0, %v511
      %513 = vmatmul.f32.gmra.mxu0 %v471
      %v514 = vpop.f32.mrf.mxu0
      %v515 = vadd.f32 0.0, %v514
      %516 = vmatmul.f32.gmra.mxu0 %v474
      %v517 = vpop.f32.mrf.mxu0
      %v518 = vadd.f32 0.0, %v517
      %519 = vmatmul.f32.gmra.mxu0 %v477
      %v520 = vpop.f32.mrf.mxu0
      %v521 = vadd.f32 0.0, %v520
      %522 = vmatmul.f32.gmra.mxu0 %v480
      %v523 = vpop.f32.mrf.mxu0
      %v524 = vadd.f32 0.0, %v523
      %525 = vdwg.mxu0
      %v526 = vadd.f32 %v439, %v503
      %v527 = vadd.f32 %v440, %v506
      %v528 = vadd.f32 %v441, %v509
      %v529 = vadd.f32 %v442, %v512
      %v530 = vadd.f32 %v443, %v515
      %v531 = vadd.f32 %v444, %v518
      %v532 = vadd.f32 %v445, %v521
      %v533 = vadd.f32 %v446, %v524
      %s534 = scalar_lea.vmem %s196, 432
      %v535 = vld [vmem:[%s534] sm:$0xff]
      %v536 = vld [vmem:[%s534 + $0x10] sm:$0xff]
      %v537 = vld [vmem:[%s534 + $0x20] sm:$0xff]
      %v538 = vld [vmem:[%s534 + $0x30] sm:$0xff]
      %v539 = vld [vmem:[%s534 + $0x40] sm:$0xff]
      %v540 = vld [vmem:[%s534 + $0x50] sm:$0xff]
      %v541 = vld [vmem:[%s534 + $0x60] sm:$0xff]
      %v542 = vld [vmem:[%s534 + $0x70] sm:$0xff]
      %s543 = scalar_lea.vmem %s1, 16
      %v544 = vld [vmem:[%s543] sm:$0xf]
      %v546 = vsel %vm223, %v535, 0
      %v549 = vsel %vm223, %v536, 0
      %v552 = vsel %vm223, %v537, 0
      %v555 = vsel %vm223, %v538, 0
      %v558 = vsel %vm223, %v539, 0
      %v561 = vsel %vm223, %v540, 0
      %v564 = vsel %vm223, %v541, 0
      %v567 = vsel %vm223, %v542, 0
      %v570 = vsel %vm248, %v544, 0
      %572 = vmatpush.msra.mxu0 0.0
      %573 = vmatpush.msra.mxu0 0.0
      %574 = vmatpush.msra.mxu0 0.0
      %575 = vmatpush.msra.mxu0 0.0
      %576 = vmatpush.msra.mxu0 0.0
      %577 = vmatpush.msra.mxu0 0.0
      %578 = vmatpush.msra.mxu0 0.0
      %579 = vmatpush.msra.mxu0 0.0
      %580 = vmatpush.msra.mxu0 0.0
      %581 = vmatpush.msra.mxu0 0.0
      %582 = vmatpush.msra.mxu0 0.0
      %583 = vmatpush.msra.mxu0 0.0
      %584 = vmatpush.msra.mxu0 0.0
      %585 = vmatpush.msra.mxu0 0.0
      %586 = vmatpush.msra.mxu0 0.0
      %587 = vmatpush.msra.mxu0 %v570
      %588 = vmatmul.f32.gmra.mxu0 %v546
      %v589 = vpop.f32.mrf.mxu0
      %v590 = vadd.f32 0.0, %v589
      %591 = vmatmul.f32.gmra.mxu0 %v549
      %v592 = vpop.f32.mrf.mxu0
      %v593 = vadd.f32 0.0, %v592
      %594 = vmatmul.f32.gmra.mxu0 %v552
      %v595 = vpop.f32.mrf.mxu0
      %v596 = vadd.f32 0.0, %v595
      %597 = vmatmul.f32.gmra.mxu0 %v555
      %v598 = vpop.f32.mrf.mxu0
      %v599 = vadd.f32 0.0, %v598
      %600 = vmatmul.f32.gmra.mxu0 %v558
      %v601 = vpop.f32.mrf.mxu0
      %v602 = vadd.f32 0.0, %v601
      %603 = vmatmul.f32.gmra.mxu0 %v561
      %v604 = vpop.f32.mrf.mxu0
      %v605 = vadd.f32 0.0, %v604
      %606 = vmatmul.f32.gmra.mxu0 %v564
      %v607 = vpop.f32.mrf.mxu0
      %v608 = vadd.f32 0.0, %v607
      %609 = vmatmul.f32.gmra.mxu0 %v567
      %v610 = vpop.f32.mrf.mxu0
      %v611 = vadd.f32 0.0, %v610
      %612 = vdwg.mxu0
      %v613 = vadd.f32 %v526, %v590
      %v614 = vadd.f32 %v527, %v593
      %v615 = vadd.f32 %v528, %v596
      %v616 = vadd.f32 %v529, %v599
      %v617 = vadd.f32 %v530, %v602
      %v618 = vadd.f32 %v531, %v605
      %v619 = vadd.f32 %v532, %v608
      %v620 = vadd.f32 %v533, %v611
      %v621 = vld [vmem:[%s447 + $0x1] sm:$0xff]
      %v622 = vld [vmem:[%s447 + $0x11] sm:$0xff]
      %v623 = vld [vmem:[%s447 + $0x21] sm:$0xff]
      %v624 = vld [vmem:[%s447 + $0x31] sm:$0xff]
      %v625 = vld [vmem:[%s447 + $0x41] sm:$0xff]
      %v626 = vld [vmem:[%s447 + $0x51] sm:$0xff]
      %v627 = vld [vmem:[%s447 + $0x61] sm:$0xff]
      %v628 = vld [vmem:[%s447 + $0x71] sm:$0xff]
      %s629 = scalar_lea.vmem %s1, 20
      %v630 = vld [vmem:[%s629] sm:$0xf]
      %v632 = vsel %vm223, %v621, 0
      %v635 = vsel %vm223, %v622, 0
      %v638 = vsel %vm223, %v623, 0
      %v641 = vsel %vm223, %v624, 0
      %v644 = vsel %vm223, %v625, 0
      %v647 = vsel %vm223, %v626, 0
      %v650 = vsel %vm223, %v627, 0
      %v653 = vsel %vm223, %v628, 0
      %v656 = vsel %vm248, %v630, 0
      %658 = vmatpush.msra.mxu0 0.0
      %659 = vmatpush.msra.mxu0 0.0
      %660 = vmatpush.msra.mxu0 0.0
      %661 = vmatpush.msra.mxu0 0.0
      %662 = vmatpush.msra.mxu0 0.0
      %663 = vmatpush.msra.mxu0 0.0
      %664 = vmatpush.msra.mxu0 0.0
      %665 = vmatpush.msra.mxu0 0.0
      %666 = vmatpush.msra.mxu0 0.0
      %667 = vmatpush.msra.mxu0 0.0
      %668 = vmatpush.msra.mxu0 0.0
      %669 = vmatpush.msra.mxu0 0.0
      %670 = vmatpush.msra.mxu0 0.0
      %671 = vmatpush.msra.mxu0 0.0
      %672 = vmatpush.msra.mxu0 0.0
      %673 = vmatpush.msra.mxu0 %v656
      %674 = vmatmul.f32.gmra.mxu0 %v632
      %v675 = vpop.f32.mrf.mxu0
      %v676 = vadd.f32 0.0, %v675
      %677 = vmatmul.f32.gmra.mxu0 %v635
      %v678 = vpop.f32.mrf.mxu0
      %v679 = vadd.f32 0.0, %v678
      %680 = vmatmul.f32.gmra.mxu0 %v638
      %v681 = vpop.f32.mrf.mxu0
      %v682 = vadd.f32 0.0, %v681
      %683 = vmatmul.f32.gmra.mxu0 %v641
      %v684 = vpop.f32.mrf.mxu0
      %v685 = vadd.f32 0.0, %v684
      %686 = vmatmul.f32.gmra.mxu0 %v644
      %v687 = vpop.f32.mrf.mxu0
      %v688 = vadd.f32 0.0, %v687
      %689 = vmatmul.f32.gmra.mxu0 %v647
      %v690 = vpop.f32.mrf.mxu0
      %v691 = vadd.f32 0.0, %v690
      %692 = vmatmul.f32.gmra.mxu0 %v650
      %v693 = vpop.f32.mrf.mxu0
      %v694 = vadd.f32 0.0, %v693
      %695 = vmatmul.f32.gmra.mxu0 %v653
      %v696 = vpop.f32.mrf.mxu0
      %v697 = vadd.f32 0.0, %v696
      %698 = vdwg.mxu0
      %v699 = vadd.f32 %v613, %v676
      %v700 = vadd.f32 %v614, %v679
      %v701 = vadd.f32 %v615, %v682
      %v702 = vadd.f32 %v616, %v685
      %v703 = vadd.f32 %v617, %v688
      %v704 = vadd.f32 %v618, %v691
      %v705 = vadd.f32 %v619, %v694
      %v706 = vadd.f32 %v620, %v697
      %s707 = scalar_lea.vmem %s196, 16
      %v708 = vld [vmem:[%s707] sm:$0xff]
      %v709 = vld [vmem:[%s707 + $0x10] sm:$0xff]
      %v710 = vld [vmem:[%s707 + $0x20] sm:$0xff]
      %v711 = vld [vmem:[%s707 + $0x30] sm:$0xff]
      %v712 = vld [vmem:[%s707 + $0x40] sm:$0xff]
      %v713 = vld [vmem:[%s707 + $0x50] sm:$0xff]
      %v714 = vld [vmem:[%s707 + $0x60] sm:$0xff]
      %v715 = vld [vmem:[%s707 + $0x70] sm:$0xff]
      %s716 = scalar_lea.vmem %s1, 24
      %v717 = vld [vmem:[%s716] sm:$0xf]
      %v719 = vsel %vm223, %v708, 0
      %v722 = vsel %vm223, %v709, 0
      %v725 = vsel %vm223, %v710, 0
      %v728 = vsel %vm223, %v711, 0
      %v731 = vsel %vm223, %v712, 0
      %v734 = vsel %vm223, %v713, 0
      %v737 = vsel %vm223, %v714, 0
      %v740 = vsel %vm223, %v715, 0
      %v743 = vsel %vm248, %v717, 0
      %745 = vmatpush.msra.mxu0 0.0
      %746 = vmatpush.msra.mxu0 0.0
      %747 = vmatpush.msra.mxu0 0.0
      %748 = vmatpush.msra.mxu0 0.0
      %749 = vmatpush.msra.mxu0 0.0
      %750 = vmatpush.msra.mxu0 0.0
      %751 = vmatpush.msra.mxu0 0.0
      %752 = vmatpush.msra.mxu0 0.0
      %753 = vmatpush.msra.mxu0 0.0
      %754 = vmatpush.msra.mxu0 0.0
      %755 = vmatpush.msra.mxu0 0.0
      %756 = vmatpush.msra.mxu0 0.0
      %757 = vmatpush.msra.mxu0 0.0
      %758 = vmatpush.msra.mxu0 0.0
      %759 = vmatpush.msra.mxu0 0.0
      %760 = vmatpush.msra.mxu0 %v743
      %761 = vmatmul.f32.gmra.mxu0 %v719
      %v762 = vpop.f32.mrf.mxu0
      %v763 = vadd.f32 0.0, %v762
      %764 = vmatmul.f32.gmra.mxu0 %v722
      %v765 = vpop.f32.mrf.mxu0
      %v766 = vadd.f32 0.0, %v765
      %767 = vmatmul.f32.gmra.mxu0 %v725
      %v768 = vpop.f32.mrf.mxu0
      %v769 = vadd.f32 0.0, %v768
      %770 = vmatmul.f32.gmra.mxu0 %v728
      %v771 = vpop.f32.mrf.mxu0
      %v772 = vadd.f32 0.0, %v771
      %773 = vmatmul.f32.gmra.mxu0 %v731
      %v774 = vpop.f32.mrf.mxu0
      %v775 = vadd.f32 0.0, %v774
      %776 = vmatmul.f32.gmra.mxu0 %v734
      %v777 = vpop.f32.mrf.mxu0
      %v778 = vadd.f32 0.0, %v777
      %779 = vmatmul.f32.gmra.mxu0 %v737
      %v780 = vpop.f32.mrf.mxu0
      %v781 = vadd.f32 0.0, %v780
      %782 = vmatmul.f32.gmra.mxu0 %v740
      %v783 = vpop.f32.mrf.mxu0
      %v784 = vadd.f32 0.0, %v783
      %785 = vdwg.mxu0
      %v786 = vadd.f32 %v699, %v763
      %v787 = vadd.f32 %v700, %v766
      %v788 = vadd.f32 %v701, %v769
      %v789 = vadd.f32 %v702, %v772
      %v790 = vadd.f32 %v703, %v775
      %v791 = vadd.f32 %v704, %v778
      %v792 = vadd.f32 %v705, %v781
      %v793 = vadd.f32 %v706, %v784
      %s794 = scalar_lea.vmem %s196, 160
      %v795 = vld [vmem:[%s794] sm:$0xff]
      %v796 = vld [vmem:[%s794 + $0x10] sm:$0xff]
      %v797 = vld [vmem:[%s794 + $0x20] sm:$0xff]
      %v798 = vld [vmem:[%s794 + $0x30] sm:$0xff]
      %v799 = vld [vmem:[%s794 + $0x40] sm:$0xff]
      %v800 = vld [vmem:[%s794 + $0x50] sm:$0xff]
      %v801 = vld [vmem:[%s794 + $0x60] sm:$0xff]
      %v802 = vld [vmem:[%s794 + $0x70] sm:$0xff]
      %s803 = scalar_lea.vmem %s1, 28
      %v804 = vld [vmem:[%s803] sm:$0xf]
      %v806 = vsel %vm223, %v795, 0
      %v809 = vsel %vm223, %v796, 0
      %v812 = vsel %vm223, %v797, 0
      %v815 = vsel %vm223, %v798, 0
      %v818 = vsel %vm223, %v799, 0
      %v821 = vsel %vm223, %v800, 0
      %v824 = vsel %vm223, %v801, 0
      %v827 = vsel %vm223, %v802, 0
      %v830 = vsel %vm248, %v804, 0
      %832 = vmatpush.msra.mxu0 0.0
      %833 = vmatpush.msra.mxu0 0.0
      %834 = vmatpush.msra.mxu0 0.0
      %835 = vmatpush.msra.mxu0 0.0
      %836 = vmatpush.msra.mxu0 0.0
      %837 = vmatpush.msra.mxu0 0.0
      %838 = vmatpush.msra.mxu0 0.0
      %839 = vmatpush.msra.mxu0 0.0
      %840 = vmatpush.msra.mxu0 0.0
      %841 = vmatpush.msra.mxu0 0.0
      %842 = vmatpush.msra.mxu0 0.0
      %843 = vmatpush.msra.mxu0 0.0
      %844 = vmatpush.msra.mxu0 0.0
      %845 = vmatpush.msra.mxu0 0.0
      %846 = vmatpush.msra.mxu0 0.0
      %847 = vmatpush.msra.mxu0 %v830
      %848 = vmatmul.f32.gmra.mxu0 %v806
      %v849 = vpop.f32.mrf.mxu0
      %v850 = vadd.f32 0.0, %v849
      %851 = vmatmul.f32.gmra.mxu0 %v809
      %v852 = vpop.f32.mrf.mxu0
      %v853 = vadd.f32 0.0, %v852
      %854 = vmatmul.f32.gmra.mxu0 %v812
      %v855 = vpop.f32.mrf.mxu0
      %v856 = vadd.f32 0.0, %v855
      %857 = vmatmul.f32.gmra.mxu0 %v815
      %v858 = vpop.f32.mrf.mxu0
      %v859 = vadd.f32 0.0, %v858
      %860 = vmatmul.f32.gmra.mxu0 %v818
      %v861 = vpop.f32.mrf.mxu0
      %v862 = vadd.f32 0.0, %v861
      %863 = vmatmul.f32.gmra.mxu0 %v821
      %v864 = vpop.f32.mrf.mxu0
      %v865 = vadd.f32 0.0, %v864
      %866 = vmatmul.f32.gmra.mxu0 %v824
      %v867 = vpop.f32.mrf.mxu0
      %v868 = vadd.f32 0.0, %v867
      %869 = vmatmul.f32.gmra.mxu0 %v827
      %v870 = vpop.f32.mrf.mxu0
      %v871 = vadd.f32 0.0, %v870
      %872 = vdwg.mxu0
      %v873 = vadd.f32 %v786, %v850
      %v874 = vadd.f32 %v787, %v853
      %v875 = vadd.f32 %v788, %v856
      %v876 = vadd.f32 %v789, %v859
      %v877 = vadd.f32 %v790, %v862
      %v878 = vadd.f32 %v791, %v865
      %v879 = vadd.f32 %v792, %v868
      %v880 = vadd.f32 %v793, %v871
      %v881 = vld [vmem:[%s707 + $0x1] sm:$0xff]
      %v882 = vld [vmem:[%s707 + $0x11] sm:$0xff]
      %v883 = vld [vmem:[%s707 + $0x21] sm:$0xff]
      %v884 = vld [vmem:[%s707 + $0x31] sm:$0xff]
      %v885 = vld [vmem:[%s707 + $0x41] sm:$0xff]
      %v886 = vld [vmem:[%s707 + $0x51] sm:$0xff]
      %v887 = vld [vmem:[%s707 + $0x61] sm:$0xff]
      %v888 = vld [vmem:[%s707 + $0x71] sm:$0xff]
      %s889 = scalar_lea.vmem %s1, 32
      %v890 = vld [vmem:[%s889] sm:$0xf]
      %v892 = vsel %vm223, %v881, 0
      %v895 = vsel %vm223, %v882, 0
      %v898 = vsel %vm223, %v883, 0
      %v901 = vsel %vm223, %v884, 0
      %v904 = vsel %vm223, %v885, 0
      %v907 = vsel %vm223, %v886, 0
      %v910 = vsel %vm223, %v887, 0
      %v913 = vsel %vm223, %v888, 0
      %v916 = vsel %vm248, %v890, 0
      %918 = vmatpush.msra.mxu0 0.0
      %919 = vmatpush.msra.mxu0 0.0
      %920 = vmatpush.msra.mxu0 0.0
      %921 = vmatpush.msra.mxu0 0.0
      %922 = vmatpush.msra.mxu0 0.0
      %923 = vmatpush.msra.mxu0 0.0
      %924 = vmatpush.msra.mxu0 0.0
      %925 = vmatpush.msra.mxu0 0.0
      %926 = vmatpush.msra.mxu0 0.0
      %927 = vmatpush.msra.mxu0 0.0
      %928 = vmatpush.msra.mxu0 0.0
      %929 = vmatpush.msra.mxu0 0.0
      %930 = vmatpush.msra.mxu0 0.0
      %931 = vmatpush.msra.mxu0 0.0
      %932 = vmatpush.msra.mxu0 0.0
      %933 = vmatpush.msra.mxu0 %v916
      %934 = vmatmul.f32.gmra.mxu0 %v892
      %v935 = vpop.f32.mrf.mxu0
      %v936 = vadd.f32 0.0, %v935
      %937 = vmatmul.f32.gmra.mxu0 %v895
      %v938 = vpop.f32.mrf.mxu0
      %v939 = vadd.f32 0.0, %v938
      %940 = vmatmul.f32.gmra.mxu0 %v898
      %v941 = vpop.f32.mrf.mxu0
      %v942 = vadd.f32 0.0, %v941
      %943 = vmatmul.f32.gmra.mxu0 %v901
      %v944 = vpop.f32.mrf.mxu0
      %v945 = vadd.f32 0.0, %v944
      %946 = vmatmul.f32.gmra.mxu0 %v904
      %v947 = vpop.f32.mrf.mxu0
      %v948 = vadd.f32 0.0, %v947
      %949 = vmatmul.f32.gmra.mxu0 %v907
      %v950 = vpop.f32.mrf.mxu0
      %v951 = vadd.f32 0.0, %v950
      %952 = vmatmul.f32.gmra.mxu0 %v910
      %v953 = vpop.f32.mrf.mxu0
      %v954 = vadd.f32 0.0, %v953
      %955 = vmatmul.f32.gmra.mxu0 %v913
      %v956 = vpop.f32.mrf.mxu0
      %v957 = vadd.f32 0.0, %v956
      %958 = vdwg.mxu0
      %v959 = vadd.f32 %v873, %v936
      %v960 = vadd.f32 %v874, %v939
      %v961 = vadd.f32 %v875, %v942
      %v962 = vadd.f32 %v876, %v945
      %v963 = vadd.f32 %v877, %v948
      %v964 = vadd.f32 %v878, %v951
      %v965 = vadd.f32 %v879, %v954
      %v966 = vadd.f32 %v880, %v957
      %v967 = vadd.f32 %v959, %v960
      %v968 = vadd.f32 %v967, %v961
      %v969 = vadd.f32 %v968, %v962
      %v970 = vadd.f32 %v969, %v963
      %v971 = vadd.f32 %v970, %v964
      %v972 = vadd.f32 %v971, %v965
      %v973 = vadd.f32 %v972, %v966
      %v974 = vrot.slane %v973, 4
      %v975 = vadd.f32 %v973, %v974
      %v976 = vrot.slane %v975, 2
      %v977 = vadd.f32 %v975, %v976
      %v978 = vrot.slane %v977, 1
      %v979 = vadd.f32 %v977, %v978
      %v980 = vmul.f32 %v979, 0.015625
      %v981 = vmul.f32 %v959, %v959
      %v982 = vmul.f32 %v960, %v960
      %v983 = vmul.f32 %v961, %v961
      %v984 = vmul.f32 %v962, %v962
      %v985 = vmul.f32 %v963, %v963
      %v986 = vmul.f32 %v964, %v964
      %v987 = vmul.f32 %v965, %v965
      %v988 = vmul.f32 %v966, %v966
      %v989 = vadd.f32 %v981, %v982
      %v990 = vadd.f32 %v989, %v983
      %v991 = vadd.f32 %v990, %v984
      %v992 = vadd.f32 %v991, %v985
      %v993 = vadd.f32 %v992, %v986
      %v994 = vadd.f32 %v993, %v987
      %v995 = vadd.f32 %v994, %v988
      %v996 = vrot.slane %v995, 4
      %v997 = vadd.f32 %v995, %v996
      %v998 = vrot.slane %v997, 2
      %v999 = vadd.f32 %v997, %v998
      %v1000 = vrot.slane %v999, 1
      %v1001 = vadd.f32 %v999, %v1000
      %v1002 = vmul.f32 %v1001, 0.015625
      %v1003 = vmul.f32 %v980, %v980
      %v1004 = vsub.f32 %v1002, %v1003
      %v1005 = vmax.f32 %v1004, 0.0
      %v1006 = vld [vmem:[%s2] sm:$0x1]
      %v1007 = vadd.f32 %v1005, 1e-05
      %v1008 = vrsqrt.pop %v1007
      %v1009 = vmul.f32 %v1008, %v1007
      %v1010 = vmul.f32 %v1009, %v1008
      %v1011 = vmul.f32 0.5, %v1010
      %v1012 = vsub.f32 1.5, %v1011
      %v1013 = vmul.f32 %v1008, %v1012
      %vm1014 = vweird.f32 %v1007
      %vm1015 = vweird.f32 %v1008
      %vm1016 = vmor %vm1014, %vm1015
      %v1017 = vsel %vm1016, %v1008, %v1013
      %v1018 = vmul.f32 %v1006, %v1017
      %v1019 = vld [vmem:[%s3] sm:$0x1]
      %v1020 = vmul.f32 %v980, %v1018
      %v1021 = vsub.f32 %v1019, %v1020
      %v1023 = vperm.slane %v1018, 0
      %v1025 = vmul.f32 %v959, %v1023
      %v1026 = vmul.f32 %v960, %v1023
      %v1027 = vmul.f32 %v961, %v1023
      %v1028 = vmul.f32 %v962, %v1023
      %v1029 = vmul.f32 %v963, %v1023
      %v1030 = vmul.f32 %v964, %v1023
      %v1031 = vmul.f32 %v965, %v1023
      %v1032 = vmul.f32 %v966, %v1023
      %v1034 = vperm.slane %v1021, 0
      %v1036 = vadd.f32 %v1025, %v1034
      %v1037 = vadd.f32 %v1026, %v1034
      %v1038 = vadd.f32 %v1027, %v1034
      %v1039 = vadd.f32 %v1028, %v1034
      %v1040 = vadd.f32 %v1029, %v1034
      %v1041 = vadd.f32 %v1030, %v1034
      %v1042 = vadd.f32 %v1031, %v1034
      %v1043 = vadd.f32 %v1032, %v1034
      %vm1044 = vcmp.ge.f32.partialorder %v1036, 0.0
      %vm1045 = vcmp.ge.f32.partialorder %v1037, 0.0
      %vm1046 = vcmp.ge.f32.partialorder %v1038, 0.0
      %vm1047 = vcmp.ge.f32.partialorder %v1039, 0.0
      %vm1048 = vcmp.ge.f32.partialorder %v1040, 0.0
      %vm1049 = vcmp.ge.f32.partialorder %v1041, 0.0
      %vm1050 = vcmp.ge.f32.partialorder %v1042, 0.0
      %vm1051 = vcmp.ge.f32.partialorder %v1043, 0.0
      %v1052 = vmul.f32 %v1036, 0.2
      %v1053 = vmul.f32 %v1037, 0.2
      %v1054 = vmul.f32 %v1038, 0.2
      %v1055 = vmul.f32 %v1039, 0.2
      %v1056 = vmul.f32 %v1040, 0.2
      %v1057 = vmul.f32 %v1041, 0.2
      %v1058 = vmul.f32 %v1042, 0.2
      %v1059 = vmul.f32 %v1043, 0.2
      %v1060 = vsel %vm1044, %v1036, %v1052
      %v1061 = vsel %vm1045, %v1037, %v1053
      %v1062 = vsel %vm1046, %v1038, %v1054
      %v1063 = vsel %vm1047, %v1039, %v1055
      %v1064 = vsel %vm1048, %v1040, %v1056
      %v1065 = vsel %vm1049, %v1041, %v1057
      %v1066 = vsel %vm1050, %v1042, %v1058
      %v1067 = vsel %vm1051, %v1043, %v1059
      %1068 = vst [vmem:[%s202] sm:$0xff] %v1060
      %1069 = vst [vmem:[%s202 + $0x8] sm:$0xff] %v1061
      %1070 = vst [vmem:[%s202 + $0x10] sm:$0xff] %v1062
      %1071 = vst [vmem:[%s202 + $0x18] sm:$0xff] %v1063
      %1072 = vst [vmem:[%s202 + $0x20] sm:$0xff] %v1064
      %1073 = vst [vmem:[%s202 + $0x28] sm:$0xff] %v1065
      %1074 = vst [vmem:[%s202 + $0x30] sm:$0xff] %v1066
      %1075 = vst [vmem:[%s202 + $0x38] sm:$0xff] %v1067
      %p1076 = scmp.lt.s32.totalorder %s15, 1
      %s1077 = scalar_select %p1076, %s15, 1
      %s1078 = smul.addr %s1077, 8
      %s1079 = smul.addr %s1078, 8
      %s1080 = scalar_lea.vmem %s4, %s1079
      // Predicated region
      $region37: #{conv_block_forward.1} parent=35 // pred_check
        %p1081 = pneg %p122
      $region38: #{conv_block_forward.1} parent=35 // pred_check_branch
        %1083 = sbr.rel (%p1081) target = $region40
      $region39: #{conv_block_forward.1} parent=35 // pred_region
        _
      $region40: #{conv_block_forward.1} parent=35 // pred_fallthru
        _
    $region36: #{conv_block_forward.1} parent=5 // pred_fallthru
      _
    %p1084 = scmp.le.s32.totalorder 2, %s10
    // Predicated region
    $region41: #{conv_block_forward.1} parent=5 // pred_check
      %p1085 = pneg %p1084
    $region42: #{conv_block_forward.1} parent=5 // pred_check_branch
      %1087 = sbr.rel (%p1085) target = $region44
    $region43: #{conv_block_forward.1} parent=5 // pred_region
      %s1088 = ssub.s32 %s10, 2
      // Predicated region
      $region45: #{conv_block_forward.1} parent=43 // pred_check
        %p1089 = pneg %p128
      $region46: #{conv_block_forward.1} parent=43 // pred_check_branch
        %1091 = sbr.rel (%p1089) target = $region48
      $region47: #{conv_block_forward.1} parent=43 // pred_region
        %p1092 = scmp.lt.s32.totalorder %s16, 1
        %s1093 = scalar_select %p1092, %s16, 1
        %s1094 = smul.addr %s1093, 8
        %s1095 = smul.addr %s1094, 8
        %s1096 = scalar_lea.vmem %s4, %s1095
      $region48: #{conv_block_forward.1} parent=43 // pred_fallthru
        _
    $region44: #{conv_block_forward.1} parent=5 // pred_fallthru
      _
  $region6: #{conv_block_forward.1} parent=0 // loop_footer
    %s14 = sadd.s32 1, %s10
  $region7: #{conv_block_forward.1} parent=0 // loop_footer_branch
    %9 = sbr.rel target = $region3
  $region8: #{conv_block_forward.1} parent=0 // loop_exit
    _

</llo_original>
